<compile_context>
chip_gen: v5e
topology: v5e:2x2
jax: 0.10.0
libtpu: 0.0.40
codegen_flags: <defaults>
</compile_context>

<pallas_src>
import functools

import jax
import jax.numpy as jnp
from jax.experimental import pallas as pl
from jax.experimental.pallas import tpu as pltpu


def _round_up(x, m):
    return ((x + m - 1) // m) * m


def _dfm_kernel(n_features, idx_ref, w_ref, b_ref, out_ref):
    """idx_ref: (F, TB) int32, pre-offset into the fused vocab space
    w_ref:   (2, V_total) fused effective weights  [row 0 = logistic, row 1 = hazard]
    b_ref:   (2,) SMEM biases [bp, bl]
    out_ref: (2, TB) -> row 0 = p, row 1 = lam   (lane-dense store)
    """
    idx = idx_ref[...]                               # (F, TB) int32
    tb = idx.shape[1]
    v_total = w_ref.shape[1]

    # Transposed multi-hot (V_total, TB): one iota, F compares, int32 accumulate,
    # a single int->float cast.  Table row ranges are disjoint, so the sum of
    # one-hots is exactly the concatenated embedding gather.
    row = jax.lax.broadcasted_iota(jnp.int32, (v_total, tb), 0)
    acc = (row == idx[0:1, :]).astype(jnp.int32)
    for i in range(1, n_features):
        acc = acc + (row == idx[i:i + 1, :]).astype(jnp.int32)
    mh = acc.astype(w_ref.dtype)                     # (V_total, TB)

    # Single fused matmul: (2, V_total) @ (V_total, TB) -> (2, TB) f32.
    z = jnp.dot(w_ref[...], mh, preferred_element_type=jnp.float32)

    # Sliced per-head epilogue: sigmoid only on the logistic row, exp only on
    # the hazard row; both stores are full-lane-width (TB multiple of 128).
    out_ref[0:1, :] = jax.nn.sigmoid(z[0:1, :] + b_ref[0])
    out_ref[1:2, :] = jnp.exp(z[1:2, :] + b_ref[1])


def pack_dfm_params(emb_tables, wp, bp, wl, bl, *, mxu_dtype=jnp.float32):
    """One-time parameter packing (call at model init, NOT per forward).

    Returns (w_eff_t, biases, offsets):
      w_eff_t: (2, V_total) = (T_blk @ [wp | wl]).T, computed per table
      biases:  (2,) f32  [bp, bl]
      offsets: (F,) int32 per-feature row offsets into the fused vocab space

    mxu_dtype=jnp.bfloat16 uses the native MXU fast path on v5e/v6e (the 0/1
    multi-hot LHS is exact in bf16) at the cost of quantizing W_eff; f32 keeps
    1e-5 parity with the PyTorch reference.
    """
    vocabs = [int(t.shape[0]) for t in emb_tables]
    dims = [int(t.shape[1]) for t in emb_tables]

    # W_eff = block_diag(tables) @ [wp | wl]  ==  per-table t @ [wp_slice | wl_slice]
    rows = []
    c = 0
    for t, d in zip(emb_tables, dims):
        w_slice = jnp.concatenate(
            [wp[c:c + d, :], wl[c:c + d, :]], axis=1).astype(jnp.float32)   # (d, 2)
        rows.append(jnp.dot(t.astype(jnp.float32), w_slice))                # (V_t, 2)
        c += d
    w_eff_t = jnp.concatenate(rows, axis=0).T.astype(mxu_dtype)             # (2, V_total)

    biases = jnp.concatenate(
        [jnp.reshape(bp, (1,)), jnp.reshape(bl, (1,))]).astype(jnp.float32)  # (2,)

    offs, acc = [], 0
    for v in vocabs:
        offs.append(acc)
        acc += v
    offsets = jnp.asarray(offs, jnp.int32)                                   # (F,)
    return w_eff_t, biases, offsets


def dfm_forward(idx, w_eff_t, biases, offsets, *, tile_b=1024):
    """DelayedFeedbackModel forward. Returns (p, lam), each (B, 1) f32."""
    B, F = idx.shape
    V_total = int(w_eff_t.shape[1])

    # Lane-dense index layout: (F, B), offset into the fused vocab space.
    idx_t = idx.astype(jnp.int32).T + offsets[:, None]                       # (F, B)

    # Batch tile: multiple of 128 lanes (lane-dense stores / (.,128) blocks),
    # capped so the grid has >= 2 "parallel" steps when B allows (v7x 2 TCs).
    tb = max(128, min(int(tile_b), _round_up(pl.cdiv(B, 2), 128)))
    B_pad = _round_up(B, tb)
    if B_pad != B:
        # Pad with index 0 (valid row); padded columns are discarded below.
        idx_t = jnp.pad(idx_t, ((0, 0), (0, B_pad - B)))
    grid = (B_pad // tb,)

    kernel = functools.partial(_dfm_kernel, F)

    out = pl.pallas_call(
        kernel,
        out_shape=jax.ShapeDtypeStruct((2, B_pad), jnp.float32),
        grid_spec=pltpu.PrefetchScalarGridSpec(
            num_scalar_prefetch=0,
            grid=grid,
            in_specs=[
                pl.BlockSpec((F, tb), lambda b: (0, b)),            # idx tile (lane = batch)
                pl.BlockSpec((2, V_total), lambda b: (0, 0)),       # fused W_eff^T
                pl.BlockSpec(memory_space=pltpu.MemorySpace.SMEM),  # biases
            ],
            out_specs=pl.BlockSpec((2, tb), lambda b: (0, b)),      # lane-dense (2, TB)
        ),
        compiler_params=pltpu.CompilerParams(
            dimension_semantics=("parallel",),        # shard batch tiles across v7x TCs
            vmem_limit_bytes=48 * 1024 * 1024,        # headroom under v7x's 64 MiB VMEM
        ),
    )(idx_t, w_eff_t, biases)

    p = out[0, :B][:, None]
    lam = out[1, :B][:, None]
    return p, lam


def make_params(key, embedding_sizes):
    """Deterministic synthetic parameters matching the module's __init__ shapes."""
    input_dim = sum(d for _, d in embedding_sizes)
    keys = jax.random.split(key, len(embedding_sizes) + 4)
    emb_tables = [
        jax.random.normal(keys[i], (vocab, dim), dtype=jnp.float32)
        for i, (vocab, dim) in enumerate(embedding_sizes)
    ]
    k_wp, k_bp, k_wl, k_bl = keys[len(embedding_sizes):]
    wp = jax.random.normal(k_wp, (input_dim, 1), dtype=jnp.float32) * 0.1
    bp = jax.random.normal(k_bp, (1, 1), dtype=jnp.float32) * 0.1
    wl = jax.random.normal(k_wl, (input_dim, 1), dtype=jnp.float32) * 0.1
    bl = jax.random.normal(k_bl, (1, 1), dtype=jnp.float32) * 0.1
    return emb_tables, wp, bp, wl, bl


def dfm_reference(idx, emb_tables, wp, bp, wl, bl):
    """Pure-JAX reference of the PyTorch forward for validation."""
    hs = [jnp.take(t, idx[:, i], axis=0) for i, t in enumerate(emb_tables)]
    h = jnp.concatenate(hs, axis=1)
    p = jax.nn.sigmoid(h @ wp + bp)
    lam = jnp.exp(h @ wl + bl)
    return p, lam


if __name__ == "__main__":
    # Small synthetic config: 3 categorical features, D = 32.
    embedding_sizes = [(11, 8), (7, 8), (5, 16)]
    B = 8

    key = jax.random.PRNGKey(0)
    k_params, k_idx = jax.random.split(key)
    emb_tables, wp, bp, wl, bl = make_params(k_params, embedding_sizes)

    idx_cols = []
    for i, (vocab, _) in enumerate(embedding_sizes):
        idx_cols.append(
            jax.random.randint(jax.random.fold_in(k_idx, i), (B,), 0, vocab,
                               dtype=jnp.int32)
        )
    idx = jnp.stack(idx_cols, axis=1)              # (B, F) int32

    # One-time packing (hoisted out of the per-forward path).
    w_eff_t, biases, offsets = pack_dfm_params(emb_tables, wp, bp, wl, bl)

    p, lam = dfm_forward(idx, w_eff_t, biases, offsets)
    jax.block_until_ready((p, lam))

    p_ref, lam_ref = dfm_reference(idx, emb_tables, wp, bp, wl, bl)
    assert p.shape == (B, 1) and lam.shape == (B, 1)
    assert jnp.allclose(p, p_ref, atol=1e-5, rtol=1e-5)
    assert jnp.allclose(lam, lam_ref, atol=1e-5, rtol=1e-5)

    print("KERNEL_OK")
</pallas_src>

<mosaic_0001>
module attributes {stable_mosaic.version = 11 : i64} {
  func.func @_dfm_kernel(%arg0: i32, %arg1: memref<3x128xi32, #tpu.memory_space<vmem>>, %arg2: memref<2x23xf32, #tpu.memory_space<vmem>>, %arg3: memref<2xf32, #tpu.memory_space<smem>>, %arg4: memref<2x128xf32, #tpu.memory_space<vmem>>) attributes {dimension_semantics = [#tpu.dimension_semantics<parallel>], iteration_bounds = array<i64: 1>, scalar_prefetch = 0 : i64, scratch_operands = 0 : i64, tpu.core_type = #tpu.core_type<tc>, window_params = [{transform_indices = @transform_0, window_bounds = array<i64: 3, 128>}, {pipeline_mode = #tpu.pipeline_mode<synchronous>, transform_indices = @transform_1, window_bounds = array<i64: 2, 23>}, {transform_indices = @transform_2, window_bounds = array<i64: 2>}, {transform_indices = @transform_3, window_bounds = array<i64: 2, 128>}]} {
    %c0 = arith.constant 0 : index
    %c0_0 = arith.constant 0 : index
    %0 = vector.load %arg1[%c0, %c0_0] : memref<3x128xi32, #tpu.memory_space<vmem>>, vector<3x128xi32>
    %1 = tpu.iota {dimensions = array<i32: 0>} : vector<23x128xi32>
    %2 = vector.extract_strided_slice %0 {offsets = [0, 0], sizes = [1, 128], strides = [1, 1]} : vector<3x128xi32> to vector<1x128xi32>
    %3 = vector.broadcast %2 : vector<1x128xi32> to vector<23x128xi32>
    %4 = arith.cmpi eq, %1, %3 : vector<23x128xi32>
    %5 = arith.extui %4 : vector<23x128xi1> to vector<23x128xi32>
    %6 = vector.extract_strided_slice %0 {offsets = [1, 0], sizes = [1, 128], strides = [1, 1]} : vector<3x128xi32> to vector<1x128xi32>
    %7 = vector.broadcast %6 : vector<1x128xi32> to vector<23x128xi32>
    %8 = arith.cmpi eq, %1, %7 : vector<23x128xi32>
    %9 = arith.extui %8 : vector<23x128xi1> to vector<23x128xi32>
    %10 = arith.addi %5, %9 : vector<23x128xi32>
    %11 = vector.extract_strided_slice %0 {offsets = [2, 0], sizes = [1, 128], strides = [1, 1]} : vector<3x128xi32> to vector<1x128xi32>
    %12 = vector.broadcast %11 : vector<1x128xi32> to vector<23x128xi32>
    %13 = arith.cmpi eq, %1, %12 : vector<23x128xi32>
    %14 = arith.extui %13 : vector<23x128xi1> to vector<23x128xi32>
    %15 = arith.addi %10, %14 : vector<23x128xi32>
    %16 = arith.sitofp %15 : vector<23x128xi32> to vector<23x128xf32>
    %c0_1 = arith.constant 0 : index
    %c0_2 = arith.constant 0 : index
    %17 = vector.load %arg2[%c0_1, %c0_2] : memref<2x23xf32, #tpu.memory_space<vmem>>, vector<2x23xf32>
    %cst = arith.constant dense<0.000000e+00> : vector<2x128xf32>
    %18 = tpu.matmul %17, %16, %cst {dimension_numbers = #tpu.dot_dimension_numbers<[1], [0], [0], [1], [0, 0, 1, 1], [], []>} : vector<2x23xf32>, vector<23x128xf32>, vector<2x128xf32> -> vector<2x128xf32>
    %19 = vector.extract_strided_slice %18 {offsets = [0, 0], sizes = [1, 128], strides = [1, 1]} : vector<2x128xf32> to vector<1x128xf32>
    %c0_3 = arith.constant 0 : index
    %20 = memref.load %arg3[%c0_3] : memref<2xf32, #tpu.memory_space<smem>>
    %21 = vector.broadcast %20 : f32 to vector<1x128xf32>
    %22 = arith.addf %19, %21 : vector<1x128xf32>
    %23 = arith.negf %22 : vector<1x128xf32>
    %24 = math.exp %23 : vector<1x128xf32>
    %cst_4 = arith.constant 1.000000e+00 : f32
    %25 = vector.broadcast %cst_4 : f32 to vector<1x128xf32>
    %26 = arith.addf %25, %24 : vector<1x128xf32>
    %27 = arith.divf %25, %26 : vector<1x128xf32>
    %c0_5 = arith.constant 0 : index
    %c0_6 = arith.constant 0 : index
    %28 = vector.load %arg4[%c0_5, %c0_6] : memref<2x128xf32, #tpu.memory_space<vmem>>, vector<1x128xf32>
    tpu.vector_store %arg4[%c0_5, %c0_6], %27 {strides = array<i32>} : memref<2x128xf32, #tpu.memory_space<vmem>>, vector<1x128xf32>,
    %29 = vector.extract_strided_slice %18 {offsets = [1, 0], sizes = [1, 128], strides = [1, 1]} : vector<2x128xf32> to vector<1x128xf32>
    %c1 = arith.constant 1 : index
    %30 = memref.load %arg3[%c1] : memref<2xf32, #tpu.memory_space<smem>>
    %31 = vector.broadcast %30 : f32 to vector<1x128xf32>
    %32 = arith.addf %29, %31 : vector<1x128xf32>
    %33 = math.exp %32 : vector<1x128xf32>
    %c1_7 = arith.constant 1 : index
    %c0_8 = arith.constant 0 : index
    %34 = vector.load %arg4[%c1_7, %c0_8] : memref<2x128xf32, #tpu.memory_space<vmem>>, vector<1x128xf32>
    tpu.vector_store %arg4[%c1_7, %c0_8], %33 {strides = array<i32>} : memref<2x128xf32, #tpu.memory_space<vmem>>, vector<1x128xf32>,
    return
  }
  func.func @transform_0(%arg0: i32) -> (i32, i32) {
    %c0_i32 = arith.constant 0 : i32
    %c0_i32_0 = arith.constant 0 : i32
    return %c0_i32, %arg0 : i32, i32
  }
  func.func @transform_1(%arg0: i32) -> (i32, i32) {
    %c0_i32 = arith.constant 0 : i32
    %c0_i32_0 = arith.constant 0 : i32
    %c0_i32_1 = arith.constant 0 : i32
    return %c0_i32, %c0_i32_0 : i32, i32
  }
  func.func @transform_2(%arg0: i32) -> i32 {
    %c0_i32 = arith.constant 0 : i32
    %c0_i32_0 = arith.constant 0 : i32
    return %c0_i32 : i32
  }
  func.func @transform_3(%arg0: i32) -> (i32, i32) {
    %c0_i32 = arith.constant 0 : i32
    %c0_i32_0 = arith.constant 0 : i32
    return %c0_i32, %arg0 : i32, i32
  }
}

</mosaic_0001>

<llo_original>
// kernel: tpu_custom_call.1
$region0: #{tpu_custom_call.1}
  #allocation0 [shape = 'u32[]', space=smem, size = 0x4, offset = 0x4, fixed_abs, tag = 'smem constant byte address 0x4 - core index']
  #allocation1 [shape = 'u32[72,128]{1,0:T(1,128)}', space=vmem, size = 0x9000, scoped, tag = 'internal scratch']
  %s0 = inlined_call_operand.hbm [shape: s32[3,128], index: 0, kind: input, shape index: {}]
  %s1 = inlined_call_operand.hbm [shape: f32[2,23], index: 1, kind: input, shape index: {}]
  %s2 = inlined_call_operand.vmem [shape: f32[2], index: 2, kind: input, shape index: {}]
  %s3 = inlined_call_operand.hbm [shape: f32[2,128], index: 3, kind: output, shape index: {}]
  %s4 = sld [smem:[#allocation0]]
  $region34: #{tpu_custom_call.1} parent=0
    _
  %s6 = ssub.s32 1, %s4
  %s7 = scalar_select 0, %s6, %s4
  $region1: #{tpu_custom_call.1} parent=0
    #allocation2 [shape = 'u8[2048]{0}', space=vmem, size = 0x800, scoped, tag = 'input window, operand 0, single buffered']
    #allocation3 [shape = 's32[1]{0}', space=sflag, size = 0x4, scoped, tag = 'scoped memory for tpu_custom_call.1']
    #allocation4 [shape = 's32[1]{0}', space=sflag, size = 0x4, scoped, tag = 'scoped memory for tpu_custom_call.1']
    #allocation5 [shape = 's32[1]{0}', space=sflag, size = 0x4, scoped, tag = 'scoped memory for tpu_custom_call.1']
    #allocation6 [shape = 'u8[1024]{0}', space=vmem, size = 0x400, scoped, tag = 'input window, operand 1, single buffered']
    #allocation7 [shape = 's32[1]{0}', space=sflag, size = 0x4, scoped, tag = 'scoped memory for tpu_custom_call.1']
    #allocation8 [shape = 'u8[512]{0}', space=smem, size = 0x200, scoped, tag = 'input window, operand 2, single buffered']
    #allocation9 [shape = 'u8[1024]{0}', space=vmem, size = 0x400, scoped, tag = 'output window, operand 0, single buffered']
    %8 = vsyncpa [#allocation3], 0
    %9 = vsyncpa [#allocation7], 0
    %10 = vsyncpa [#allocation5], 0
    %11 = vsyncpa [#allocation4], 0
    // Predicated region
    $region2: #{tpu_custom_call.1} parent=1 // pred_check
      _
    $region3: #{tpu_custom_call.1} parent=1 // pred_check_branch
      %13 = sbr.rel (0) target = $region5
    $region4: #{tpu_custom_call.1} parent=1 // pred_region
      %15 = vsyncadd [#allocation3], 0
      %s17 = sshll.u32 %s0, 4
      %s18 = int_to_ptr.hbm [resolvable:$true] %s17
      %s19 = sshll.u32 [#allocation2], 4
      %s20 = int_to_ptr.vmem [resolvable:$true] %s19
      %22 = dma.hbm_to_vmem [thread:$0]  %s18, 64, %s20, [#allocation3]
    $region5: #{tpu_custom_call.1} parent=1 // pred_fallthru
      _
    // Predicated region
    $region6: #{tpu_custom_call.1} parent=1 // pred_check
      _
    $region7: #{tpu_custom_call.1} parent=1 // pred_check_branch
      %24 = sbr.rel (0) target = $region9
    $region8: #{tpu_custom_call.1} parent=1 // pred_region
      %26 = vsyncadd [#allocation7], 0
      %s28 = sshll.u32 %s1, 4
      %s29 = int_to_ptr.hbm [resolvable:$true] %s28
      %s30 = sshll.u32 [#allocation6], 4
      %s31 = int_to_ptr.vmem [resolvable:$true] %s30
      %33 = dma.hbm_to_vmem [thread:$0]  %s29, 32, %s31, [#allocation7]
    $region9: #{tpu_custom_call.1} parent=1 // pred_fallthru
      _
    // Predicated region
    $region10: #{tpu_custom_call.1} parent=1 // pred_check
      _
    $region11: #{tpu_custom_call.1} parent=1 // pred_check_branch
      %35 = sbr.rel (0) target = $region13
    $region12: #{tpu_custom_call.1} parent=1 // pred_region
      %37 = vsyncadd [#allocation5], 0
      %s39 = sshll.u32 %s2, 4
      %s40 = int_to_ptr.vmem [resolvable:$true] %s39
      %42 = dma.vmem_to_smem %s40, 16, [#allocation8], [#allocation5]
    $region13: #{tpu_custom_call.1} parent=1 // pred_fallthru
      _
    // Predicated region
    $region14: #{tpu_custom_call.1} parent=1 // pred_check
      _
    $region15: #{tpu_custom_call.1} parent=1 // pred_check_branch
      %44 = sbr.rel (0) target = $region17
    $region16: #{tpu_custom_call.1} parent=1 // pred_region
      %46 = dma.done [#allocation3], 64
    $region17: #{tpu_custom_call.1} parent=1 // pred_fallthru
      _
    // Predicated region
    $region18: #{tpu_custom_call.1} parent=1 // pred_check
      _
    $region19: #{tpu_custom_call.1} parent=1 // pred_check_branch
      %48 = sbr.rel (0) target = $region21
    $region20: #{tpu_custom_call.1} parent=1 // pred_region
      %50 = dma.done [#allocation7], 32
    $region21: #{tpu_custom_call.1} parent=1 // pred_fallthru
      _
    // Predicated region
    $region22: #{tpu_custom_call.1} parent=1 // pred_check
      _
    $region23: #{tpu_custom_call.1} parent=1 // pred_check_branch
      %52 = sbr.rel (0) target = $region25
    $region24: #{tpu_custom_call.1} parent=1 // pred_region
      %54 = dma.done [#allocation5], 16
    $region25: #{tpu_custom_call.1} parent=1 // pred_fallthru
      _
    %55 = sfence
    %v56 = vld [vmem:[#allocation2] sm:$0x7]
    %v57 = vlaneseq
    %v58 = vshrl.u32 %v57, 7
    %v59 = vadd.s32 %v58, 8
    %v60 = vadd.s32 %v58, 16
    %v61 = vperm.slane %v56, 0
    %vm62 = vcmp.eq.s32.totalorder %v58, %v61
    %vm63 = vcmp.eq.s32.totalorder %v59, %v61
    %vm64 = vcmp.eq.s32.totalorder %v60, %v61
    %v65 = vsel %vm62, 1, 0
    %v66 = vsel %vm63, 1, 0
    %v67 = vsel %vm64, 1, 0
    %v68 = vperm.slane %v56, 1
    %vm69 = vcmp.eq.s32.totalorder %v58, %v68
    %vm70 = vcmp.eq.s32.totalorder %v59, %v68
    %vm71 = vcmp.eq.s32.totalorder %v60, %v68
    %v72 = vsel %vm69, 1, 0
    %v73 = vsel %vm70, 1, 0
    %v74 = vsel %vm71, 1, 0
    %v75 = vadd.s32 %v65, %v72
    %v76 = vadd.s32 %v66, %v73
    %v77 = vadd.s32 %v67, %v74
    %v78 = vperm.slane %v56, 2
    %vm79 = vcmp.eq.s32.totalorder %v58, %v78
    %vm80 = vcmp.eq.s32.totalorder %v59, %v78
    %vm81 = vcmp.eq.s32.totalorder %v60, %v78
    %v82 = vsel %vm79, 1, 0
    %v83 = vsel %vm80, 1, 0
    %v84 = vsel %vm81, 1, 0
    %v85 = vadd.s32 %v75, %v82
    %v86 = vadd.s32 %v76, %v83
    %v87 = vadd.s32 %v77, %v84
    %v88 = vcvt.s32.f32 %v85
    %v89 = vcvt.s32.f32 %v86
    %v90 = vcvt.s32.f32 %v87
    %v91 = vld [vmem:[#allocation6] sm:$0x3]
    %vm92 = vcmask 187392
    %v94 = vsel %vm92, %v91, 0
    %vm96 = vcmask 1046528
    %v98 = vsel %vm96, %v90, 0
    %100 = vmatpush.msra.mxu0 0.0
    %101 = vmatpush.msra.mxu0 0.0
    %102 = vmatpush.msra.mxu0 0.0
    %103 = vmatpush.msra.mxu0 0.0
    %104 = vmatpush.msra.mxu0 0.0
    %105 = vmatpush.msra.mxu0 0.0
    %106 = vmatpush.msra.mxu0 0.0
    %107 = vmatpush.msra.mxu0 0.0
    %108 = vmatpush.msra.mxu0 0.0
    %109 = vmatpush.msra.mxu0 0.0
    %110 = vmatpush.msra.mxu0 0.0
    %111 = vmatpush.msra.mxu0 0.0
    %112 = vmatpush.msra.mxu0 0.0
    %113 = vmatpush.msra.mxu0 %v98
    %114 = vmatpush.msra.mxu0 %v89
    %115 = vmatpush.msra.mxu0 %v88
    %116 = vmatmul.f32.gmra.mxu0 %v94
    %v117 = vpop.f32.mrf.mxu0
    %v118 = vadd.f32 0.0, %v117
    %119 = vdwg.mxu0
    %s120 = sld [smem:[#allocation8]]
    %v121 = vstv %s120
    %v122 = vadd.f32 %v118, %v121
    %v123 = vxor.u32 %v122, 2147483648
    %v124 = vmul.f32 %v123, 1.442695
    %v125 = vpow.pop %v124
    %v126 = vadd.f32 %v125, 1.0
    %v127 = vrcp.pop %v126
    %v128 = vmul.f32 %v126, %v127
    %v129 = vsub.f32 1.0, %v128
    %v130 = vmul.f32 %v127, %v129
    %v131 = vadd.f32 %v127, %v130
    %vm132 = vweird.f32 %v126
    %vm133 = vweird.f32 %v127
    %vm134 = vmor %vm132, %vm133
    %v135 = vsel %vm134, %v127, %v131
    %v136 = vand.u32 2147483647, %v126
    %vm137 = vcmp.eq.f32.partialorder %v136, 8.507059e+37
    %v138 = vand.u32 %v126, 2147483648
    %v139 = vor.u32 1.1754944e-38, %v138
    %v140 = vsel %vm137, %v139, %v135
    %v141 = vmul.f32 1.0, %v140
    %142 = vst [vmem:[#allocation9] sm:$0x1] %v141
    %s143 = sld [smem:[#allocation8 + $0x1]]
    %v144 = vstv %s143
    %v145 = vadd.f32 %v118, %v144
    %v146 = vmul.f32 %v145, 1.442695
    %v147 = vpow.pop %v146
    %148 = vst [vmem:[#allocation9] sm:$0x2] %v147
    // Predicated region
    $region26: #{tpu_custom_call.1} parent=1 // pred_check
      _
    $region27: #{tpu_custom_call.1} parent=1 // pred_check_branch
      %150 = sbr.rel (0) target = $region29
    $region28: #{tpu_custom_call.1} parent=1 // pred_region
      %152 = vsyncadd [#allocation4], 0
      %s154 = sshll.u32 [#allocation9], 4
      %s155 = int_to_ptr.vmem [resolvable:$true] %s154
      %s156 = sshll.u32 %s3, 4
      %s157 = int_to_ptr.hbm [resolvable:$true] %s156
      %159 = dma.vmem_to_hbm [thread:$0]  %s155, 32, %s157, [#allocation4]
    $region29: #{tpu_custom_call.1} parent=1 // pred_fallthru
      _
    // Predicated region
    $region30: #{tpu_custom_call.1} parent=1 // pred_check
      _
    $region31: #{tpu_custom_call.1} parent=1 // pred_check_branch
      %161 = sbr.rel (0) target = $region33
    $region32: #{tpu_custom_call.1} parent=1 // pred_region
      %163 = dma.done [#allocation4], 32
    $region33: #{tpu_custom_call.1} parent=1 // pred_fallthru
      _
    %164 = vsyncpa [#allocation3], 1
    %165 = vsyncpa [#allocation7], 1
    %166 = vsyncpa [#allocation4], 1
    %167 = vsyncpa [#allocation5], 1

</llo_original>
